<compile_context>
chip_gen: v6e
topology: v6e:2x2x1
jax: 0.10.0
libtpu: 0.0.40
codegen_flags: <defaults>
</compile_context>

<pallas_src>
import functools

import jax
import jax.numpy as jnp
from jax import lax
from jax.experimental import pallas as pl
from jax.experimental.pallas import tpu as pltpu


def _cdiv(a, b):
    return -(-a // b)


def _layernorm_kernel(x_ref, g_ref, b_ref, o_ref, *, eps):
    # x_ref/o_ref: (nc_tile, H, w_tile); g_ref/b_ref: (H, 1).
    # Normalize along H (sublane axis); W stays lane-dense on the lane axis.
    x = x_ref[...].astype(jnp.float32)
    inv_h = jnp.float32(1.0 / x.shape[-2])
    mean = jnp.sum(x, axis=-2, keepdims=True) * inv_h          # (nc, 1, w)
    xc = x - mean                                              # reused below
    var = jnp.sum(xc * xc, axis=-2, keepdims=True) * inv_h     # (nc, 1, w)
    inv = lax.rsqrt(var + eps)                                 # (nc, 1, w)
    g = g_ref[...].astype(jnp.float32)                         # (H, 1) -> bcast nc, w
    b = b_ref[...].astype(jnp.float32)                         # (H, 1)
    o_ref[...] = ((xc * inv) * g + b).astype(o_ref.dtype)


def _default_target_block_bytes():
    # v7x: 64 MiB VMEM but ~3.2 TB/s HBM per TC -> bigger blocks amortize the
    # ~0.35 us fixed per-grid-step cost.  v5e/v6e (128 MiB VMEM): ~2 MiB is
    # already at the streaming-roofline knee.
    try:
        cap = getattr(pltpu.get_tpu_info(), "vmem_capacity_bytes", None)
    except Exception:
        cap = None
    if cap is not None and cap <= (96 << 20):
        return 4 << 20
    return 2 << 20


def layer_norm_pallas(x, gamma, beta, *, eps=1e-5, target_block_bytes=None):
    """x: (N, C, H, W), gamma/beta: (H,). Returns (N, C, H, W)."""
    N, C, H, W = x.shape
    assert gamma.shape == (H,) and beta.shape == (H,)
    if target_block_bytes is None:
        target_block_bytes = _default_target_block_bytes()

    NC = N * C
    # Free reshapes only (no transposes).
    x3 = x.reshape(NC, H, W)
    g2 = gamma.reshape(H, 1)
    b2 = beta.reshape(H, 1)

    # Lane-dense output: pad W up to a full vreg lane width when W < 128 so
    # stores are unmasked.  For W >= 128, w_tile is a multiple of 128 and the
    # cdiv grid masks only the ragged edge block.
    if W < 128:
        Wp = 128
        x3 = jnp.pad(x3, ((0, 0), (0, 0), (0, Wp - W)))
    else:
        Wp = W

    itemsize = jnp.dtype(x.dtype).itemsize

    if Wp % 128 == 0:
        w_tile = min(Wp, 512)
    else:
        w_tile = min((Wp // 128) * 128, 512)

    bytes_per_row = H * w_tile * itemsize
    nc_tile = int(max(1, min(NC, target_block_bytes // bytes_per_row)))

    def vmem_estimate(nc_t, w_t):
        blk = nc_t * H * w_t
        io = 2 * 2 * blk * itemsize   # double-buffered input + output DMA blocks
        tmp = 3 * blk * 4             # in-kernel f32 temps (x cast, xc, epilogue)
        return io + tmp

    # Keep the full working set within a budget that is safe on every
    # generation (v5e 16 MiB scoped default, v7x 64 MiB physical).
    VMEM_BUDGET = 36 << 20
    while vmem_estimate(nc_tile, w_tile) > VMEM_BUDGET:
        if nc_tile > 1:
            nc_tile = (nc_tile + 1) // 2
        elif w_tile > 128:
            w_tile -= 128
        else:
            break

    # Pipeline depth / megacore: aim for >= 4 grid steps when there is enough
    # work (v7x has two TensorCores); prefer splitting NC, then W.  Tiny
    # problems stay single-step to avoid pure per-step overhead.
    MIN_STEPS = 4
    MIN_BLOCK_BYTES = 256 << 10

    def n_steps():
        return _cdiv(NC, nc_tile) * _cdiv(Wp, w_tile)

    while (n_steps() < MIN_STEPS and nc_tile > 1
           and nc_tile * H * w_tile * itemsize > MIN_BLOCK_BYTES):
        nc_tile = (nc_tile + 1) // 2
    while (n_steps() < MIN_STEPS and w_tile > 128
           and nc_tile * H * w_tile * itemsize > MIN_BLOCK_BYTES):
        w_tile -= 128

    est = vmem_estimate(nc_tile, w_tile)
    vmem_limit = (int(min(max(int(est * 1.3), 32 << 20), 48 << 20))
                  if est > (12 << 20) else None)

    grid = (_cdiv(NC, nc_tile), _cdiv(Wp, w_tile))

    out3 = pl.pallas_call(
        functools.partial(_layernorm_kernel, eps=eps),
        out_shape=jax.ShapeDtypeStruct((NC, H, Wp), x.dtype),
        grid_spec=pltpu.PrefetchScalarGridSpec(
            num_scalar_prefetch=0,
            grid=grid,
            in_specs=[
                pl.BlockSpec((nc_tile, H, w_tile), lambda i, j: (i, 0, j)),
                pl.BlockSpec((H, 1), lambda i, j: (0, 0)),
                pl.BlockSpec((H, 1), lambda i, j: (0, 0)),
            ],
            out_specs=pl.BlockSpec((nc_tile, H, w_tile), lambda i, j: (i, 0, j)),
        ),
        compiler_params=pltpu.CompilerParams(
            dimension_semantics=("parallel", "parallel"),
            vmem_limit_bytes=vmem_limit,
        ),
    )(x3, g2, b2)

    if Wp != W:
        out3 = out3[:, :, :W]
    return out3.reshape(N, C, H, W)


def _layer_norm_ref(x, gamma, beta, eps=1e-5):
    # Pure-JAX reference of the PyTorch module (two-pass, with transposes).
    xt = jnp.transpose(x, (0, 1, 3, 2)).astype(jnp.float32)
    mean = jnp.mean(xt, axis=-1, keepdims=True)
    var = jnp.mean((xt - mean) ** 2, axis=-1, keepdims=True)
    y = (xt - mean) * lax.rsqrt(var + eps) * gamma + beta
    return jnp.transpose(y, (0, 1, 3, 2)).astype(x.dtype)


if __name__ == "__main__":
    key = jax.random.PRNGKey(0)
    N, C, H, W = 2, 4, 16, 16          # num_features = H = 16
    x = jax.random.normal(key, (N, C, H, W), dtype=jnp.float32)

    # Deterministic parameters matching nn.LayerNorm defaults.
    gamma = jnp.ones((H,), dtype=jnp.float32)
    beta = jnp.zeros((H,), dtype=jnp.float32)

    out = layer_norm_pallas(x, gamma, beta)
    out = jax.block_until_ready(out)

    ref = _layer_norm_ref(x, gamma, beta)
    assert out.shape == (N, C, H, W)
    assert jnp.max(jnp.abs(out - ref)) < 3e-5

    print("KERNEL_OK")
</pallas_src>

<mosaic_0001>
module attributes {stable_mosaic.version = 11 : i64} {
  func.func @_layernorm_kernel(%arg0: i32, %arg1: i32, %arg2: memref<8x16x128xf32, #tpu.memory_space<vmem>>, %arg3: memref<16x1xf32, #tpu.memory_space<vmem>>, %arg4: memref<16x1xf32, #tpu.memory_space<vmem>>, %arg5: memref<8x16x128xf32, #tpu.memory_space<vmem>>) attributes {dimension_semantics = [#tpu.dimension_semantics<parallel>, #tpu.dimension_semantics<parallel>], iteration_bounds = array<i64: 1, 1>, scalar_prefetch = 0 : i64, scratch_operands = 0 : i64, tpu.core_type = #tpu.core_type<tc>, window_params = [{transform_indices = @transform_0, window_bounds = array<i64: 8, 16, 128>}, {pipeline_mode = #tpu.pipeline_mode<synchronous>, transform_indices = @transform_1, window_bounds = array<i64: 16, 1>}, {pipeline_mode = #tpu.pipeline_mode<synchronous>, transform_indices = @transform_2, window_bounds = array<i64: 16, 1>}, {transform_indices = @transform_3, window_bounds = array<i64: 8, 16, 128>}]} {
    %c0 = arith.constant 0 : index
    %c0_0 = arith.constant 0 : index
    %c0_1 = arith.constant 0 : index
    %0 = vector.load %arg2[%c0, %c0_0, %c0_1] : memref<8x16x128xf32, #tpu.memory_space<vmem>>, vector<8x16x128xf32>
    %cst = arith.constant dense<0.000000e+00> : vector<8x128xf32>
    %1 = vector.multi_reduction <add>, %0, %cst [1] : vector<8x16x128xf32> to vector<8x128xf32>
    %2 = vector.shape_cast %1 : vector<8x128xf32> to vector<8x1x128xf32>
    %cst_2 = arith.constant 6.250000e-02 : f32
    %3 = vector.broadcast %cst_2 : f32 to vector<8x1x128xf32>
    %4 = arith.mulf %2, %3 : vector<8x1x128xf32>
    %5 = vector.broadcast %4 : vector<8x1x128xf32> to vector<8x16x128xf32>
    %6 = arith.subf %0, %5 : vector<8x16x128xf32>
    %7 = arith.mulf %6, %6 : vector<8x16x128xf32>
    %cst_3 = arith.constant dense<0.000000e+00> : vector<8x128xf32>
    %8 = vector.multi_reduction <add>, %7, %cst_3 [1] : vector<8x16x128xf32> to vector<8x128xf32>
    %9 = vector.shape_cast %8 : vector<8x128xf32> to vector<8x1x128xf32>
    %cst_4 = arith.constant 6.250000e-02 : f32
    %10 = vector.broadcast %cst_4 : f32 to vector<8x1x128xf32>
    %11 = arith.mulf %9, %10 : vector<8x1x128xf32>
    %cst_5 = arith.constant 9.99999974E-6 : f32
    %12 = vector.broadcast %cst_5 : f32 to vector<8x1x128xf32>
    %13 = arith.addf %11, %12 : vector<8x1x128xf32>
    %14 = math.rsqrt %13 : vector<8x1x128xf32>
    %c0_6 = arith.constant 0 : index
    %c0_7 = arith.constant 0 : index
    %15 = vector.load %arg3[%c0_6, %c0_7] : memref<16x1xf32, #tpu.memory_space<vmem>>, vector<16x1xf32>
    %c0_8 = arith.constant 0 : index
    %c0_9 = arith.constant 0 : index
    %16 = vector.load %arg4[%c0_8, %c0_9] : memref<16x1xf32, #tpu.memory_space<vmem>>, vector<16x1xf32>
    %17 = vector.broadcast %14 : vector<8x1x128xf32> to vector<8x16x128xf32>
    %18 = arith.mulf %6, %17 : vector<8x16x128xf32>
    %19 = vector.shape_cast %15 : vector<16x1xf32> to vector<1x16x1xf32>
    %20 = vector.broadcast %19 : vector<1x16x1xf32> to vector<8x16x128xf32>
    %21 = arith.mulf %18, %20 : vector<8x16x128xf32>
    %22 = vector.shape_cast %16 : vector<16x1xf32> to vector<1x16x1xf32>
    %23 = vector.broadcast %22 : vector<1x16x1xf32> to vector<8x16x128xf32>
    %24 = arith.addf %21, %23 : vector<8x16x128xf32>
    %c0_10 = arith.constant 0 : index
    %c0_11 = arith.constant 0 : index
    %c0_12 = arith.constant 0 : index
    %25 = vector.load %arg5[%c0_10, %c0_11, %c0_12] : memref<8x16x128xf32, #tpu.memory_space<vmem>>, vector<8x16x128xf32>
    tpu.vector_store %arg5[%c0_10, %c0_11, %c0_12], %24 {strides = array<i32>} : memref<8x16x128xf32, #tpu.memory_space<vmem>>, vector<8x16x128xf32>,
    return
  }
  func.func @transform_0(%arg0: i32, %arg1: i32) -> (i32, i32, i32) {
    %c0_i32 = arith.constant 0 : i32
    %c0_i32_0 = arith.constant 0 : i32
    return %arg0, %c0_i32, %arg1 : i32, i32, i32
  }
  func.func @transform_1(%arg0: i32, %arg1: i32) -> (i32, i32) {
    %c0_i32 = arith.constant 0 : i32
    %c0_i32_0 = arith.constant 0 : i32
    %c0_i32_1 = arith.constant 0 : i32
    return %c0_i32, %c0_i32_0 : i32, i32
  }
  func.func @transform_2(%arg0: i32, %arg1: i32) -> (i32, i32) {
    %c0_i32 = arith.constant 0 : i32
    %c0_i32_0 = arith.constant 0 : i32
    %c0_i32_1 = arith.constant 0 : i32
    return %c0_i32, %c0_i32_0 : i32, i32
  }
  func.func @transform_3(%arg0: i32, %arg1: i32) -> (i32, i32, i32) {
    %c0_i32 = arith.constant 0 : i32
    %c0_i32_0 = arith.constant 0 : i32
    return %arg0, %c0_i32, %arg1 : i32, i32, i32
  }
}

</mosaic_0001>

<llo_original>
// kernel: tpu_custom_call.1
$region0: #{tpu_custom_call.1}
  #allocation0 [shape = 'u32[]', space=smem, size = 0x4, offset = 0x4, fixed_abs, tag = 'smem constant byte address 0x4 - core index']
  #allocation1 [shape = 'u32[144,128]{1,0:T(1,128)}', space=vmem, size = 0x12000, scoped, tag = 'internal scratch']
  %s0 = inlined_call_operand.hbm [shape: f32[8,16,128], index: 0, kind: input, shape index: {}]
  %s1 = inlined_call_operand.vmem [shape: f32[16,1], index: 1, kind: input, shape index: {}]
  %s2 = inlined_call_operand.vmem [shape: f32[16,1], index: 2, kind: input, shape index: {}]
  %s3 = inlined_call_operand.hbm [shape: f32[8,16,128], index: 3, kind: output, shape index: {}]
  %s4 = sld [smem:[#allocation0]]
  $region26: #{tpu_custom_call.1} parent=0
    _
  %s6 = ssub.s32 1, %s4
  %s7 = scalar_select 0, %s6, %s4
  $region1: #{tpu_custom_call.1} parent=0
    #allocation2 [shape = 'u8[65536]{0}', space=vmem, size = 0x10000, scoped, tag = 'input window, operand 0, single buffered']
    #allocation3 [shape = 's32[1]{0}', space=sflag, size = 0x4, scoped, tag = 'scoped memory for tpu_custom_call.1']
    #allocation4 [shape = 's32[1]{0}', space=sflag, size = 0x4, scoped, tag = 'scoped memory for tpu_custom_call.1']
    #allocation5 [shape = 'u8[65536]{0}', space=vmem, size = 0x10000, scoped, tag = 'output window, operand 0, single buffered']
    %8 = vsyncpa [#allocation3], 0
    %9 = vsyncpa [#allocation4], 0
    // Predicated region
    $region2: #{tpu_custom_call.1} parent=1 // pred_check
      _
    $region3: #{tpu_custom_call.1} parent=1 // pred_check_branch
      %11 = sbr.rel (0) target = $region5
    $region4: #{tpu_custom_call.1} parent=1 // pred_region
      %s13 = ssub.s32 2048, 2048
      %14 = vsyncadd [#allocation3], %s13
      %s15 = sshll.u32 [#allocation2], 4
      %s16 = int_to_ptr.vmem [resolvable:$true] %s15
      %21 = dma.hbm_to_vmem [thread:$0]  %s0, 2048, %s16, [#allocation3], 128, 128, 8
    $region5: #{tpu_custom_call.1} parent=1 // pred_fallthru
      _
    // Predicated region
    $region6: #{tpu_custom_call.1} parent=1 // pred_check
      _
    $region7: #{tpu_custom_call.1} parent=1 // pred_check_branch
      %23 = sbr.rel (0) target = $region9
    $region8: #{tpu_custom_call.1} parent=1 // pred_region
      _
    $region9: #{tpu_custom_call.1} parent=1 // pred_fallthru
      _
    // Predicated region
    $region10: #{tpu_custom_call.1} parent=1 // pred_check
      _
    $region11: #{tpu_custom_call.1} parent=1 // pred_check_branch
      %25 = sbr.rel (0) target = $region13
    $region12: #{tpu_custom_call.1} parent=1 // pred_region
      _
    $region13: #{tpu_custom_call.1} parent=1 // pred_fallthru
      _
    // Predicated region
    $region14: #{tpu_custom_call.1} parent=1 // pred_check
      _
    $region15: #{tpu_custom_call.1} parent=1 // pred_check_branch
      %27 = sbr.rel (0) target = $region17
    $region16: #{tpu_custom_call.1} parent=1 // pred_region
      %28 = dma.done [#allocation3], 2048
    $region17: #{tpu_custom_call.1} parent=1 // pred_fallthru
      _
    %v29 = vld [vmem:[#allocation2] sm:$0xff]
    %v30 = vld [vmem:[#allocation2 + $0x8] sm:$0xff]
    %v31 = vld [vmem:[#allocation2 + $0x10] sm:$0xff]
    %v32 = vld [vmem:[#allocation2 + $0x18] sm:$0xff]
    %v33 = vld [vmem:[#allocation2 + $0x20] sm:$0xff]
    %v34 = vld [vmem:[#allocation2 + $0x28] sm:$0xff]
    %v35 = vld [vmem:[#allocation2 + $0x30] sm:$0xff]
    %v36 = vld [vmem:[#allocation2 + $0x38] sm:$0xff]
    %v37 = vld [vmem:[#allocation2 + $0x40] sm:$0xff]
    %v38 = vld [vmem:[#allocation2 + $0x48] sm:$0xff]
    %v39 = vld [vmem:[#allocation2 + $0x50] sm:$0xff]
    %v40 = vld [vmem:[#allocation2 + $0x58] sm:$0xff]
    %v41 = vld [vmem:[#allocation2 + $0x60] sm:$0xff]
    %v42 = vld [vmem:[#allocation2 + $0x68] sm:$0xff]
    %v43 = vld [vmem:[#allocation2 + $0x70] sm:$0xff]
    %v44 = vld [vmem:[#allocation2 + $0x78] sm:$0xff]
    %v45 = vadd.f32 %v29, %v30
    %v46 = vrot.slane %v45, 4
    %v47 = vadd.f32 %v45, %v46
    %v48 = vrot.slane %v47, 2
    %v49 = vadd.f32 %v47, %v48
    %v50 = vrot.slane %v49, 1
    %v51 = vadd.f32 %v49, %v50
    %v52 = vadd.f32 %v31, %v32
    %v53 = vrot.slane %v52, 4
    %v54 = vadd.f32 %v52, %v53
    %v55 = vrot.slane %v54, 2
    %v56 = vadd.f32 %v54, %v55
    %v57 = vrot.slane %v56, 1
    %v58 = vadd.f32 %v56, %v57
    %v59 = vadd.f32 %v33, %v34
    %v60 = vrot.slane %v59, 4
    %v61 = vadd.f32 %v59, %v60
    %v62 = vrot.slane %v61, 2
    %v63 = vadd.f32 %v61, %v62
    %v64 = vrot.slane %v63, 1
    %v65 = vadd.f32 %v63, %v64
    %v66 = vadd.f32 %v35, %v36
    %v67 = vrot.slane %v66, 4
    %v68 = vadd.f32 %v66, %v67
    %v69 = vrot.slane %v68, 2
    %v70 = vadd.f32 %v68, %v69
    %v71 = vrot.slane %v70, 1
    %v72 = vadd.f32 %v70, %v71
    %v73 = vadd.f32 %v37, %v38
    %v74 = vrot.slane %v73, 4
    %v75 = vadd.f32 %v73, %v74
    %v76 = vrot.slane %v75, 2
    %v77 = vadd.f32 %v75, %v76
    %v78 = vrot.slane %v77, 1
    %v79 = vadd.f32 %v77, %v78
    %v80 = vadd.f32 %v39, %v40
    %v81 = vrot.slane %v80, 4
    %v82 = vadd.f32 %v80, %v81
    %v83 = vrot.slane %v82, 2
    %v84 = vadd.f32 %v82, %v83
    %v85 = vrot.slane %v84, 1
    %v86 = vadd.f32 %v84, %v85
    %v87 = vadd.f32 %v41, %v42
    %v88 = vrot.slane %v87, 4
    %v89 = vadd.f32 %v87, %v88
    %v90 = vrot.slane %v89, 2
    %v91 = vadd.f32 %v89, %v90
    %v92 = vrot.slane %v91, 1
    %v93 = vadd.f32 %v91, %v92
    %v94 = vadd.f32 %v43, %v44
    %v95 = vrot.slane %v94, 4
    %v96 = vadd.f32 %v94, %v95
    %v97 = vrot.slane %v96, 2
    %v98 = vadd.f32 %v96, %v97
    %v99 = vrot.slane %v98, 1
    %v100 = vadd.f32 %v98, %v99
    %v101 = vmul.f32 %v51, 0.0625
    %v102 = vmul.f32 %v58, 0.0625
    %v103 = vmul.f32 %v65, 0.0625
    %v104 = vmul.f32 %v72, 0.0625
    %v105 = vmul.f32 %v79, 0.0625
    %v106 = vmul.f32 %v86, 0.0625
    %v107 = vmul.f32 %v93, 0.0625
    %v108 = vmul.f32 %v100, 0.0625
    %v109 = vsub.f32 %v29, %v101
    %v110 = vsub.f32 %v30, %v101
    %v111 = vsub.f32 %v31, %v102
    %v112 = vsub.f32 %v32, %v102
    %v113 = vsub.f32 %v33, %v103
    %v114 = vsub.f32 %v34, %v103
    %v115 = vsub.f32 %v35, %v104
    %v116 = vsub.f32 %v36, %v104
    %v117 = vsub.f32 %v37, %v105
    %v118 = vsub.f32 %v38, %v105
    %v119 = vsub.f32 %v39, %v106
    %v120 = vsub.f32 %v40, %v106
    %v121 = vsub.f32 %v41, %v107
    %v122 = vsub.f32 %v42, %v107
    %v123 = vsub.f32 %v43, %v108
    %v124 = vsub.f32 %v44, %v108
    %v125 = vmul.f32 %v109, %v109
    %v126 = vmul.f32 %v110, %v110
    %v127 = vmul.f32 %v111, %v111
    %v128 = vmul.f32 %v112, %v112
    %v129 = vmul.f32 %v113, %v113
    %v130 = vmul.f32 %v114, %v114
    %v131 = vmul.f32 %v115, %v115
    %v132 = vmul.f32 %v116, %v116
    %v133 = vmul.f32 %v117, %v117
    %v134 = vmul.f32 %v118, %v118
    %v135 = vmul.f32 %v119, %v119
    %v136 = vmul.f32 %v120, %v120
    %v137 = vmul.f32 %v121, %v121
    %v138 = vmul.f32 %v122, %v122
    %v139 = vmul.f32 %v123, %v123
    %v140 = vmul.f32 %v124, %v124
    %v141 = vadd.f32 %v125, %v126
    %v142 = vrot.slane %v141, 4
    %v143 = vadd.f32 %v141, %v142
    %v144 = vrot.slane %v143, 2
    %v145 = vadd.f32 %v143, %v144
    %v146 = vrot.slane %v145, 1
    %v147 = vadd.f32 %v145, %v146
    %v148 = vadd.f32 %v127, %v128
    %v149 = vrot.slane %v148, 4
    %v150 = vadd.f32 %v148, %v149
    %v151 = vrot.slane %v150, 2
    %v152 = vadd.f32 %v150, %v151
    %v153 = vrot.slane %v152, 1
    %v154 = vadd.f32 %v152, %v153
    %v155 = vadd.f32 %v129, %v130
    %v156 = vrot.slane %v155, 4
    %v157 = vadd.f32 %v155, %v156
    %v158 = vrot.slane %v157, 2
    %v159 = vadd.f32 %v157, %v158
    %v160 = vrot.slane %v159, 1
    %v161 = vadd.f32 %v159, %v160
    %v162 = vadd.f32 %v131, %v132
    %v163 = vrot.slane %v162, 4
    %v164 = vadd.f32 %v162, %v163
    %v165 = vrot.slane %v164, 2
    %v166 = vadd.f32 %v164, %v165
    %v167 = vrot.slane %v166, 1
    %v168 = vadd.f32 %v166, %v167
    %v169 = vadd.f32 %v133, %v134
    %v170 = vrot.slane %v169, 4
    %v171 = vadd.f32 %v169, %v170
    %v172 = vrot.slane %v171, 2
    %v173 = vadd.f32 %v171, %v172
    %v174 = vrot.slane %v173, 1
    %v175 = vadd.f32 %v173, %v174
    %v176 = vadd.f32 %v135, %v136
    %v177 = vrot.slane %v176, 4
    %v178 = vadd.f32 %v176, %v177
    %v179 = vrot.slane %v178, 2
    %v180 = vadd.f32 %v178, %v179
    %v181 = vrot.slane %v180, 1
    %v182 = vadd.f32 %v180, %v181
    %v183 = vadd.f32 %v137, %v138
    %v184 = vrot.slane %v183, 4
    %v185 = vadd.f32 %v183, %v184
    %v186 = vrot.slane %v185, 2
    %v187 = vadd.f32 %v185, %v186
    %v188 = vrot.slane %v187, 1
    %v189 = vadd.f32 %v187, %v188
    %v190 = vadd.f32 %v139, %v140
    %v191 = vrot.slane %v190, 4
    %v192 = vadd.f32 %v190, %v191
    %v193 = vrot.slane %v192, 2
    %v194 = vadd.f32 %v192, %v193
    %v195 = vrot.slane %v194, 1
    %v196 = vadd.f32 %v194, %v195
    %v197 = vmul.f32 %v147, 0.0625
    %v198 = vmul.f32 %v154, 0.0625
    %v199 = vmul.f32 %v161, 0.0625
    %v200 = vmul.f32 %v168, 0.0625
    %v201 = vmul.f32 %v175, 0.0625
    %v202 = vmul.f32 %v182, 0.0625
    %v203 = vmul.f32 %v189, 0.0625
    %v204 = vmul.f32 %v196, 0.0625
    %v205 = vadd.f32 %v197, 1e-05
    %v206 = vadd.f32 %v198, 1e-05
    %v207 = vadd.f32 %v199, 1e-05
    %v208 = vadd.f32 %v200, 1e-05
    %v209 = vadd.f32 %v201, 1e-05
    %v210 = vadd.f32 %v202, 1e-05
    %v211 = vadd.f32 %v203, 1e-05
    %v212 = vadd.f32 %v204, 1e-05
    %v213 = vrsqrt.pop %v205
    %v214 = vrsqrt.pop %v206
    %v215 = vrsqrt.pop %v207
    %v216 = vrsqrt.pop %v208
    %v217 = vrsqrt.pop %v209
    %v218 = vrsqrt.pop %v210
    %v219 = vrsqrt.pop %v211
    %v220 = vrsqrt.pop %v212
    %v221 = vld [vmem:[%s1] sm:$0xff]
    %v222 = vld [vmem:[%s1 + $0x8] sm:$0xff]
    %v223 = vld [vmem:[%s2] sm:$0xff]
    %v224 = vld [vmem:[%s2 + $0x8] sm:$0xff]
    %v225 = vmul.f32 %v109, %v213
    %v226 = vmul.f32 %v110, %v213
    %v227 = vmul.f32 %v111, %v214
    %v228 = vmul.f32 %v112, %v214
    %v229 = vmul.f32 %v113, %v215
    %v230 = vmul.f32 %v114, %v215
    %v231 = vmul.f32 %v115, %v216
    %v232 = vmul.f32 %v116, %v216
    %v233 = vmul.f32 %v117, %v217
    %v234 = vmul.f32 %v118, %v217
    %v235 = vmul.f32 %v119, %v218
    %v236 = vmul.f32 %v120, %v218
    %v237 = vmul.f32 %v121, %v219
    %v238 = vmul.f32 %v122, %v219
    %v239 = vmul.f32 %v123, %v220
    %v240 = vmul.f32 %v124, %v220
    %242 = vset.pattern.permute.xlu0 0
    %243 = vperm.xlu0 %242, %v221
    %v244 = vpop.permute.xlu0 %243
    %247 = vset.pattern.permute.xlu0 0
    %248 = vperm.xlu0 %247, %v222
    %v249 = vpop.permute.xlu0 %248
    %v251 = vmul.f32 %v225, %v244
    %v252 = vmul.f32 %v226, %v249
    %v253 = vmul.f32 %v227, %v244
    %v254 = vmul.f32 %v228, %v249
    %v255 = vmul.f32 %v229, %v244
    %v256 = vmul.f32 %v230, %v249
    %v257 = vmul.f32 %v231, %v244
    %v258 = vmul.f32 %v232, %v249
    %v259 = vmul.f32 %v233, %v244
    %v260 = vmul.f32 %v234, %v249
    %v261 = vmul.f32 %v235, %v244
    %v262 = vmul.f32 %v236, %v249
    %v263 = vmul.f32 %v237, %v244
    %v264 = vmul.f32 %v238, %v249
    %v265 = vmul.f32 %v239, %v244
    %v266 = vmul.f32 %v240, %v249
    %268 = vset.pattern.permute.xlu0 0
    %269 = vperm.xlu0 %268, %v223
    %v270 = vpop.permute.xlu0 %269
    %273 = vset.pattern.permute.xlu0 0
    %274 = vperm.xlu0 %273, %v224
    %v275 = vpop.permute.xlu0 %274
    %v277 = vadd.f32 %v251, %v270
    %v278 = vadd.f32 %v252, %v275
    %v279 = vadd.f32 %v253, %v270
    %v280 = vadd.f32 %v254, %v275
    %v281 = vadd.f32 %v255, %v270
    %v282 = vadd.f32 %v256, %v275
    %v283 = vadd.f32 %v257, %v270
    %v284 = vadd.f32 %v258, %v275
    %v285 = vadd.f32 %v259, %v270
    %v286 = vadd.f32 %v260, %v275
    %v287 = vadd.f32 %v261, %v270
    %v288 = vadd.f32 %v262, %v275
    %v289 = vadd.f32 %v263, %v270
    %v290 = vadd.f32 %v264, %v275
    %v291 = vadd.f32 %v265, %v270
    %v292 = vadd.f32 %v266, %v275
    %293 = vst [vmem:[#allocation5] sm:$0xff] %v277
    %294 = vst [vmem:[#allocation5 + $0x8] sm:$0xff] %v278
    %295 = vst [vmem:[#allocation5 + $0x10] sm:$0xff] %v279
    %296 = vst [vmem:[#allocation5 + $0x18] sm:$0xff] %v280
    %297 = vst [vmem:[#allocation5 + $0x20] sm:$0xff] %v281
    %298 = vst [vmem:[#allocation5 + $0x28] sm:$0xff] %v282
    %299 = vst [vmem:[#allocation5 + $0x30] sm:$0xff] %v283
    %300 = vst [vmem:[#allocation5 + $0x38] sm:$0xff] %v284
    %301 = vst [vmem:[#allocation5 + $0x40] sm:$0xff] %v285
    %302 = vst [vmem:[#allocation5 + $0x48] sm:$0xff] %v286
    %303 = vst [vmem:[#allocation5 + $0x50] sm:$0xff] %v287
    %304 = vst [vmem:[#allocation5 + $0x58] sm:$0xff] %v288
    %305 = vst [vmem:[#allocation5 + $0x60] sm:$0xff] %v289
    %306 = vst [vmem:[#allocation5 + $0x68] sm:$0xff] %v290
    %307 = vst [vmem:[#allocation5 + $0x70] sm:$0xff] %v291
    %308 = vst [vmem:[#allocation5 + $0x78] sm:$0xff] %v292
    // Predicated region
    $region18: #{tpu_custom_call.1} parent=1 // pred_check
      _
    $region19: #{tpu_custom_call.1} parent=1 // pred_check_branch
      %310 = sbr.rel (0) target = $region21
    $region20: #{tpu_custom_call.1} parent=1 // pred_region
      %s312 = ssub.s32 2048, 2048
      %313 = vsyncadd [#allocation4], %s312
      %s314 = sshll.u32 [#allocation5], 4
      %s315 = int_to_ptr.vmem [resolvable:$true] %s314
      %320 = dma.vmem_to_hbm [thread:$0]  %s315, 2048, %s3, [#allocation4], 128, 128, 8
    $region21: #{tpu_custom_call.1} parent=1 // pred_fallthru
      _
    // Predicated region
    $region22: #{tpu_custom_call.1} parent=1 // pred_check
      _
    $region23: #{tpu_custom_call.1} parent=1 // pred_check_branch
      %322 = sbr.rel (0) target = $region25
    $region24: #{tpu_custom_call.1} parent=1 // pred_region
      %323 = dma.done [#allocation4], 2048
    $region25: #{tpu_custom_call.1} parent=1 // pred_fallthru
      _
    %324 = vsyncpa [#allocation3], 1
    %325 = vsyncpa [#allocation4], 1

</llo_original>
